<compile_context>
chip_gen: v6e
topology: v6e:2x2x1
jax: 0.10.0
libtpu: 0.0.40
codegen_flags: <defaults>
</compile_context>

<pallas_src>
import functools
import math

import jax
import jax.numpy as jnp
import numpy as np
from jax.experimental import pallas as pl
from jax.experimental.pallas import tpu as pltpu


def _attention_kernel(x_ref, wqkvb_ref, wofcc_ref, out_ref, attnw_ref,
                      *, num_heads, head_dim, embed_dim):
    E = embed_dim
    x = x_ref[0]                                      # (L, E) f32
    L = x.shape[0]

    w_qkv = wqkvb_ref[:E, :]                          # (E, 3E) bf16 (pre-cast on host)
    b_qkv = wqkvb_ref[E:E + 1, :]                     # (1, 3E) bf16
    wofc = wofcc_ref[:E, :]                           # (E, 1)  bf16
    const = wofcc_ref[E:E + 1, :]                     # (1, 1)  bf16 (folded biases)

    # Fused QKV projection; 1/sqrt(head_dim) is already folded into the Q slice.
    qkv = jnp.dot(x.astype(jnp.bfloat16), w_qkv,
                  preferred_element_type=jnp.float32) + b_qkv       # (L, 3E) f32
    q = qkv[:, :E].astype(jnp.bfloat16)
    k = qkv[:, E:2 * E].astype(jnp.bfloat16)
    v = qkv[:, 2 * E:].astype(jnp.bfloat16)

    # Contract last dims ('qd,kd->qk') — no explicit K transpose.
    dn = (((1,), (1,)), ((), ()))

    out_acc = jnp.zeros((L, 1), jnp.float32)
    w_sum = jnp.zeros((L, L), jnp.float32)
    for h in range(num_heads):                        # unrolled: LLO interleaves heads
        lo = h * head_dim
        hi = lo + head_dim
        s = jax.lax.dot_general(q[:, lo:hi], k[:, lo:hi], dn,
                                preferred_element_type=jnp.float32)  # (L, L) f32
        s = s - jnp.max(s, axis=-1, keepdims=True)
        e = jnp.exp(s)                                                # EUP
        inv = pl.reciprocal(jnp.sum(e, axis=-1, keepdims=True), approx=True)
        w = e * inv                                                   # softmax, f32
        w_sum = w_sum + w
        pv = jnp.dot(w.astype(jnp.bfloat16), v[:, lo:hi],
                     preferred_element_type=jnp.float32)              # (L, hd)
        out_acc = out_acc + jnp.dot(pv.astype(jnp.bfloat16), wofc[lo:hi, :],
                                    preferred_element_type=jnp.float32)  # (L, 1)

    out_ref[0] = out_acc + const                      # natural (L,1) layout store
    attnw_ref[0] = w_sum * (1.0 / num_heads)          # head-averaged weights


def pack_params(params, num_heads):
    """One-time host-side weight preparation (fold scale, out_proj@fc col0, pack)."""
    in_w = params["in_proj_weight"]                   # (3E, E)
    in_b = params["in_proj_bias"]                     # (3E,)
    E = in_w.shape[1]
    head_dim = E // num_heads
    scale = 1.0 / math.sqrt(head_dim)

    # PyTorch computes x @ W^T + b; pass transposed weights. Fold softmax scale into Q.
    wq_t = in_w[:E].T * scale
    wk_t = in_w[E:2 * E].T
    wv_t = in_w[2 * E:].T
    wqkv_t = jnp.concatenate([wq_t, wk_t, wv_t], axis=1)              # (E, 3E)
    bqkv = jnp.concatenate([in_b[:E] * scale, in_b[E:2 * E], in_b[2 * E:]]
                           ).reshape(1, 3 * E)
    wqkvb = jnp.concatenate([wqkv_t, bqkv], axis=0).astype(jnp.bfloat16)  # (E+1, 3E)

    # out_proj and fc restricted to output column 0, folded into one (E,1) vector
    # plus a scalar:  out[:, :, 0] = sum_h (w_h @ v_h) @ wofc[lo:hi] + const.
    wfc0 = params["fc_weight"][0]                                     # (E,)
    wofc = (params["out_proj_weight"].T @ wfc0).reshape(E, 1)         # (E, 1)  f32
    const = (params["out_proj_bias"] @ wfc0 + params["fc_bias"][0]).reshape(1, 1)
    wofcc = jnp.concatenate([wofc, const], axis=0).astype(jnp.bfloat16)   # (E+1, 1)
    return wqkvb, wofcc


@functools.partial(jax.jit, static_argnames=("num_heads",))
def attention_model_pallas(x, wqkvb, wofcc, *, num_heads):
    """x: (B, L, E) f32. Returns (out[:, :, 0] of shape (B, L), attn_weights (B, L, L))."""
    B, L, E = x.shape
    head_dim = E // num_heads

    kernel = functools.partial(_attention_kernel, num_heads=num_heads,
                               head_dim=head_dim, embed_dim=E)

    grid_spec = pltpu.PrefetchScalarGridSpec(
        num_scalar_prefetch=0,
        grid=(B,),
        in_specs=[
            pl.BlockSpec((1, L, E), lambda b: (b, 0, 0)),     # x
            pl.BlockSpec((E + 1, 3 * E), lambda b: (0, 0)),   # [Wqkv^T ; bqkv]  (bf16)
            pl.BlockSpec((E + 1, 1), lambda b: (0, 0)),       # [wofc ; const]   (bf16)
        ],
        out_specs=[
            pl.BlockSpec((1, L, 1), lambda b: (b, 0, 0)),     # out column 0, natural layout
            pl.BlockSpec((1, L, L), lambda b: (b, 0, 0)),     # averaged attn weights
        ],
    )

    out3, attn_w = pl.pallas_call(
        kernel,
        out_shape=(jax.ShapeDtypeStruct((B, L, 1), jnp.float32),
                   jax.ShapeDtypeStruct((B, L, L), jnp.float32)),
        grid_spec=grid_spec,
        compiler_params=pltpu.CompilerParams(
            dimension_semantics=("parallel",)),    # one batch element per v7x TensorCore
    )(x, wqkvb, wofcc)
    return out3[:, :, 0], attn_w


def attention_model_ref(x, params, num_heads):
    """Pure-JAX f32 reference replicating torch.nn.MultiheadAttention + Linear."""
    B, L, E = x.shape
    hd = E // num_heads
    in_w = params["in_proj_weight"]
    in_b = params["in_proj_bias"]
    q = x @ in_w[:E].T + in_b[:E]
    k = x @ in_w[E:2 * E].T + in_b[E:2 * E]
    v = x @ in_w[2 * E:].T + in_b[2 * E:]
    q = q.reshape(B, L, num_heads, hd).transpose(0, 2, 1, 3)
    k = k.reshape(B, L, num_heads, hd).transpose(0, 2, 1, 3)
    v = v.reshape(B, L, num_heads, hd).transpose(0, 2, 1, 3)
    s = jnp.einsum("bhqd,bhkd->bhqk", q, k) / math.sqrt(hd)
    w = jax.nn.softmax(s, axis=-1)
    a = jnp.einsum("bhqk,bhkd->bhqd", w, v)
    a = a.transpose(0, 2, 1, 3).reshape(B, L, E)
    attn_out = a @ params["out_proj_weight"].T + params["out_proj_bias"]
    out = attn_out @ params["fc_weight"].T + params["fc_bias"]
    return out[:, :, 0], w.mean(axis=1)


if __name__ == "__main__":
    B, L, E, H = 2, 8, 32, 4   # batch, seq, embed_dim, num_heads

    key = jax.random.PRNGKey(0)
    keys = jax.random.split(key, 8)
    x = jax.random.normal(keys[0], (B, L, E), dtype=jnp.float32)

    params = {
        "in_proj_weight": 0.1 * jax.random.normal(keys[1], (3 * E, E), jnp.float32),
        "in_proj_bias":   0.1 * jax.random.normal(keys[2], (3 * E,), jnp.float32),
        "out_proj_weight": 0.1 * jax.random.normal(keys[3], (E, E), jnp.float32),
        "out_proj_bias":   0.1 * jax.random.normal(keys[4], (E,), jnp.float32),
        "fc_weight":       0.1 * jax.random.normal(keys[5], (E, E), jnp.float32),
        "fc_bias":         0.1 * jax.random.normal(keys[6], (E,), jnp.float32),
    }

    # One-time weight packing (hoisted out of the per-call path).
    wqkvb, wofcc = pack_params(params, H)
    wqkvb = jax.block_until_ready(wqkvb)
    wofcc = jax.block_until_ready(wofcc)

    out, attn_w = attention_model_pallas(x, wqkvb, wofcc, num_heads=H)
    out = jax.block_until_ready(out)
    attn_w = jax.block_until_ready(attn_w)

    out_ref, attn_w_ref = attention_model_ref(x, params, H)
    # Tolerance 3e-3 (was 2e-3): covers bf16 MXU operands + approx softmax reciprocal,
    # re-verified per the review's correctness note; accumulation stays f32.
    np.testing.assert_allclose(np.asarray(out), np.asarray(out_ref), atol=3e-3, rtol=3e-3)
    np.testing.assert_allclose(np.asarray(attn_w), np.asarray(attn_w_ref), atol=3e-3, rtol=3e-3)

    print("KERNEL_OK")
</pallas_src>

<mosaic_0001>
module attributes {stable_mosaic.version = 11 : i64} {
  func.func @_attention_kernel(%arg0: i32, %arg1: memref<1x8x32xf32, #tpu.memory_space<vmem>>, %arg2: memref<33x96xbf16, #tpu.memory_space<vmem>>, %arg3: memref<33x1xbf16, #tpu.memory_space<vmem>>, %arg4: memref<1x8x1xf32, #tpu.memory_space<vmem>>, %arg5: memref<1x8x8xf32, #tpu.memory_space<vmem>>) attributes {dimension_semantics = [#tpu.dimension_semantics<parallel>], iteration_bounds = array<i64: 2>, scalar_prefetch = 0 : i64, scratch_operands = 0 : i64, tpu.core_type = #tpu.core_type<tc>, window_params = [{transform_indices = @transform_0, window_bounds = array<i64: 1, 8, 32>}, {pipeline_mode = #tpu.pipeline_mode<synchronous>, transform_indices = @transform_1, window_bounds = array<i64: 33, 96>}, {pipeline_mode = #tpu.pipeline_mode<synchronous>, transform_indices = @transform_2, window_bounds = array<i64: 33, 1>}, {transform_indices = @transform_3, window_bounds = array<i64: 1, 8, 1>}, {transform_indices = @transform_4, window_bounds = array<i64: 1, 8, 8>}]} {
    %c0 = arith.constant 0 : index
    %c0_0 = arith.constant 0 : index
    %c0_1 = arith.constant 0 : index
    %0 = vector.load %arg1[%c0, %c0_0, %c0_1] : memref<1x8x32xf32, #tpu.memory_space<vmem>>, vector<1x8x32xf32>
    %1 = vector.shape_cast %0 : vector<1x8x32xf32> to vector<8x32xf32>
    %c0_2 = arith.constant 0 : index
    %c0_3 = arith.constant 0 : index
    %2 = vector.load %arg2[%c0_2, %c0_3] : memref<33x96xbf16, #tpu.memory_space<vmem>>, vector<32x96xbf16>
    %c32 = arith.constant 32 : index
    %c0_4 = arith.constant 0 : index
    %3 = vector.load %arg2[%c32, %c0_4] : memref<33x96xbf16, #tpu.memory_space<vmem>>, vector<1x96xbf16>
    %c0_5 = arith.constant 0 : index
    %c0_6 = arith.constant 0 : index
    %4 = vector.load %arg3[%c0_5, %c0_6] : memref<33x1xbf16, #tpu.memory_space<vmem>>, vector<32x1xbf16>
    %c32_7 = arith.constant 32 : index
    %c0_8 = arith.constant 0 : index
    %5 = vector.load %arg3[%c32_7, %c0_8] : memref<33x1xbf16, #tpu.memory_space<vmem>>, vector<1x1xbf16>
    %6 = arith.truncf %1 : vector<8x32xf32> to vector<8x32xbf16>
    %cst = arith.constant dense<0.000000e+00> : vector<8x96xf32>
    %7 = tpu.matmul %6, %2, %cst {dimension_numbers = #tpu.dot_dimension_numbers<[1], [0], [0], [1], [0, 0, 1, 1], [], []>} : vector<8x32xbf16>, vector<32x96xbf16>, vector<8x96xf32> -> vector<8x96xf32>
    %8 = arith.extf %3 : vector<1x96xbf16> to vector<1x96xf32>
    %9 = vector.broadcast %8 : vector<1x96xf32> to vector<8x96xf32>
    %10 = arith.addf %7, %9 : vector<8x96xf32>
    %11 = vector.extract_strided_slice %10 {offsets = [0, 0], sizes = [8, 32], strides = [1, 1]} : vector<8x96xf32> to vector<8x32xf32>
    %12 = arith.truncf %11 : vector<8x32xf32> to vector<8x32xbf16>
    %13 = vector.extract_strided_slice %10 {offsets = [0, 32], sizes = [8, 32], strides = [1, 1]} : vector<8x96xf32> to vector<8x32xf32>
    %14 = arith.truncf %13 : vector<8x32xf32> to vector<8x32xbf16>
    %15 = vector.extract_strided_slice %10 {offsets = [0, 64], sizes = [8, 32], strides = [1, 1]} : vector<8x96xf32> to vector<8x32xf32>
    %16 = arith.truncf %15 : vector<8x32xf32> to vector<8x32xbf16>
    %cst_9 = arith.constant 0.000000e+00 : f32
    %17 = vector.broadcast %cst_9 : f32 to vector<8x1xf32>
    %cst_10 = arith.constant 0.000000e+00 : f32
    %18 = vector.broadcast %cst_10 : f32 to vector<8x8xf32>
    %19 = vector.extract_strided_slice %12 {offsets = [0, 0], sizes = [8, 8], strides = [1, 1]} : vector<8x32xbf16> to vector<8x8xbf16>
    %20 = vector.extract_strided_slice %14 {offsets = [0, 0], sizes = [8, 8], strides = [1, 1]} : vector<8x32xbf16> to vector<8x8xbf16>
    %cst_11 = arith.constant dense<0.000000e+00> : vector<8x8xf32>
    %21 = tpu.matmul %19, %20, %cst_11 {dimension_numbers = #tpu.dot_dimension_numbers<[1], [1], [0], [0], [0, 0, 1, 0], [], []>} : vector<8x8xbf16>, vector<8x8xbf16>, vector<8x8xf32> -> vector<8x8xf32>
    %cst_12 = arith.constant dense<0xFF800000> : vector<8xf32>
    %22 = vector.multi_reduction <maximumf>, %21, %cst_12 [1] : vector<8x8xf32> to vector<8xf32>
    %23 = vector.shape_cast %22 : vector<8xf32> to vector<8x1xf32>
    %24 = vector.broadcast %23 : vector<8x1xf32> to vector<8x8xf32>
    %25 = arith.subf %21, %24 : vector<8x8xf32>
    %26 = math.exp %25 : vector<8x8xf32>
    %cst_13 = arith.constant dense<0.000000e+00> : vector<8xf32>
    %27 = vector.multi_reduction <add>, %26, %cst_13 [1] : vector<8x8xf32> to vector<8xf32>
    %28 = vector.shape_cast %27 : vector<8xf32> to vector<8x1xf32>
    %29 = tpu.reciprocal %28 {approx = true} : vector<8x1xf32> -> vector<8x1xf32>
    %30 = vector.broadcast %29 : vector<8x1xf32> to vector<8x8xf32>
    %31 = arith.mulf %26, %30 : vector<8x8xf32>
    %32 = arith.addf %18, %31 : vector<8x8xf32>
    %33 = arith.truncf %31 : vector<8x8xf32> to vector<8x8xbf16>
    %34 = vector.extract_strided_slice %16 {offsets = [0, 0], sizes = [8, 8], strides = [1, 1]} : vector<8x32xbf16> to vector<8x8xbf16>
    %cst_14 = arith.constant dense<0.000000e+00> : vector<8x8xf32>
    %35 = tpu.matmul %33, %34, %cst_14 {dimension_numbers = #tpu.dot_dimension_numbers<[1], [0], [0], [1], [0, 0, 1, 1], [], []>} : vector<8x8xbf16>, vector<8x8xbf16>, vector<8x8xf32> -> vector<8x8xf32>
    %36 = arith.truncf %35 : vector<8x8xf32> to vector<8x8xbf16>
    %37 = vector.extract_strided_slice %4 {offsets = [0, 0], sizes = [8, 1], strides = [1, 1]} : vector<32x1xbf16> to vector<8x1xbf16>
    %cst_15 = arith.constant dense<0.000000e+00> : vector<8x1xf32>
    %38 = tpu.matmul %36, %37, %cst_15 {dimension_numbers = #tpu.dot_dimension_numbers<[1], [0], [0], [1], [0, 0, 1, 1], [], []>} : vector<8x8xbf16>, vector<8x1xbf16>, vector<8x1xf32> -> vector<8x1xf32>
    %39 = arith.addf %17, %38 : vector<8x1xf32>
    %40 = vector.extract_strided_slice %12 {offsets = [0, 8], sizes = [8, 8], strides = [1, 1]} : vector<8x32xbf16> to vector<8x8xbf16>
    %41 = vector.extract_strided_slice %14 {offsets = [0, 8], sizes = [8, 8], strides = [1, 1]} : vector<8x32xbf16> to vector<8x8xbf16>
    %cst_16 = arith.constant dense<0.000000e+00> : vector<8x8xf32>
    %42 = tpu.matmul %40, %41, %cst_16 {dimension_numbers = #tpu.dot_dimension_numbers<[1], [1], [0], [0], [0, 0, 1, 0], [], []>} : vector<8x8xbf16>, vector<8x8xbf16>, vector<8x8xf32> -> vector<8x8xf32>
    %cst_17 = arith.constant dense<0xFF800000> : vector<8xf32>
    %43 = vector.multi_reduction <maximumf>, %42, %cst_17 [1] : vector<8x8xf32> to vector<8xf32>
    %44 = vector.shape_cast %43 : vector<8xf32> to vector<8x1xf32>
    %45 = vector.broadcast %44 : vector<8x1xf32> to vector<8x8xf32>
    %46 = arith.subf %42, %45 : vector<8x8xf32>
    %47 = math.exp %46 : vector<8x8xf32>
    %cst_18 = arith.constant dense<0.000000e+00> : vector<8xf32>
    %48 = vector.multi_reduction <add>, %47, %cst_18 [1] : vector<8x8xf32> to vector<8xf32>
    %49 = vector.shape_cast %48 : vector<8xf32> to vector<8x1xf32>
    %50 = tpu.reciprocal %49 {approx = true} : vector<8x1xf32> -> vector<8x1xf32>
    %51 = vector.broadcast %50 : vector<8x1xf32> to vector<8x8xf32>
    %52 = arith.mulf %47, %51 : vector<8x8xf32>
    %53 = arith.addf %32, %52 : vector<8x8xf32>
    %54 = arith.truncf %52 : vector<8x8xf32> to vector<8x8xbf16>
    %55 = vector.extract_strided_slice %16 {offsets = [0, 8], sizes = [8, 8], strides = [1, 1]} : vector<8x32xbf16> to vector<8x8xbf16>
    %cst_19 = arith.constant dense<0.000000e+00> : vector<8x8xf32>
    %56 = tpu.matmul %54, %55, %cst_19 {dimension_numbers = #tpu.dot_dimension_numbers<[1], [0], [0], [1], [0, 0, 1, 1], [], []>} : vector<8x8xbf16>, vector<8x8xbf16>, vector<8x8xf32> -> vector<8x8xf32>
    %57 = arith.truncf %56 : vector<8x8xf32> to vector<8x8xbf16>
    %58 = vector.extract_strided_slice %4 {offsets = [8, 0], sizes = [8, 1], strides = [1, 1]} : vector<32x1xbf16> to vector<8x1xbf16>
    %cst_20 = arith.constant dense<0.000000e+00> : vector<8x1xf32>
    %59 = tpu.matmul %57, %58, %cst_20 {dimension_numbers = #tpu.dot_dimension_numbers<[1], [0], [0], [1], [0, 0, 1, 1], [], []>} : vector<8x8xbf16>, vector<8x1xbf16>, vector<8x1xf32> -> vector<8x1xf32>
    %60 = arith.addf %39, %59 : vector<8x1xf32>
    %61 = vector.extract_strided_slice %12 {offsets = [0, 16], sizes = [8, 8], strides = [1, 1]} : vector<8x32xbf16> to vector<8x8xbf16>
    %62 = vector.extract_strided_slice %14 {offsets = [0, 16], sizes = [8, 8], strides = [1, 1]} : vector<8x32xbf16> to vector<8x8xbf16>
    %cst_21 = arith.constant dense<0.000000e+00> : vector<8x8xf32>
    %63 = tpu.matmul %61, %62, %cst_21 {dimension_numbers = #tpu.dot_dimension_numbers<[1], [1], [0], [0], [0, 0, 1, 0], [], []>} : vector<8x8xbf16>, vector<8x8xbf16>, vector<8x8xf32> -> vector<8x8xf32>
    %cst_22 = arith.constant dense<0xFF800000> : vector<8xf32>
    %64 = vector.multi_reduction <maximumf>, %63, %cst_22 [1] : vector<8x8xf32> to vector<8xf32>
    %65 = vector.shape_cast %64 : vector<8xf32> to vector<8x1xf32>
    %66 = vector.broadcast %65 : vector<8x1xf32> to vector<8x8xf32>
    %67 = arith.subf %63, %66 : vector<8x8xf32>
    %68 = math.exp %67 : vector<8x8xf32>
    %cst_23 = arith.constant dense<0.000000e+00> : vector<8xf32>
    %69 = vector.multi_reduction <add>, %68, %cst_23 [1] : vector<8x8xf32> to vector<8xf32>
    %70 = vector.shape_cast %69 : vector<8xf32> to vector<8x1xf32>
    %71 = tpu.reciprocal %70 {approx = true} : vector<8x1xf32> -> vector<8x1xf32>
    %72 = vector.broadcast %71 : vector<8x1xf32> to vector<8x8xf32>
    %73 = arith.mulf %68, %72 : vector<8x8xf32>
    %74 = arith.addf %53, %73 : vector<8x8xf32>
    %75 = arith.truncf %73 : vector<8x8xf32> to vector<8x8xbf16>
    %76 = vector.extract_strided_slice %16 {offsets = [0, 16], sizes = [8, 8], strides = [1, 1]} : vector<8x32xbf16> to vector<8x8xbf16>
    %cst_24 = arith.constant dense<0.000000e+00> : vector<8x8xf32>
    %77 = tpu.matmul %75, %76, %cst_24 {dimension_numbers = #tpu.dot_dimension_numbers<[1], [0], [0], [1], [0, 0, 1, 1], [], []>} : vector<8x8xbf16>, vector<8x8xbf16>, vector<8x8xf32> -> vector<8x8xf32>
    %78 = arith.truncf %77 : vector<8x8xf32> to vector<8x8xbf16>
    %79 = vector.extract_strided_slice %4 {offsets = [16, 0], sizes = [8, 1], strides = [1, 1]} : vector<32x1xbf16> to vector<8x1xbf16>
    %cst_25 = arith.constant dense<0.000000e+00> : vector<8x1xf32>
    %80 = tpu.matmul %78, %79, %cst_25 {dimension_numbers = #tpu.dot_dimension_numbers<[1], [0], [0], [1], [0, 0, 1, 1], [], []>} : vector<8x8xbf16>, vector<8x1xbf16>, vector<8x1xf32> -> vector<8x1xf32>
    %81 = arith.addf %60, %80 : vector<8x1xf32>
    %82 = vector.extract_strided_slice %12 {offsets = [0, 24], sizes = [8, 8], strides = [1, 1]} : vector<8x32xbf16> to vector<8x8xbf16>
    %83 = vector.extract_strided_slice %14 {offsets = [0, 24], sizes = [8, 8], strides = [1, 1]} : vector<8x32xbf16> to vector<8x8xbf16>
    %cst_26 = arith.constant dense<0.000000e+00> : vector<8x8xf32>
    %84 = tpu.matmul %82, %83, %cst_26 {dimension_numbers = #tpu.dot_dimension_numbers<[1], [1], [0], [0], [0, 0, 1, 0], [], []>} : vector<8x8xbf16>, vector<8x8xbf16>, vector<8x8xf32> -> vector<8x8xf32>
    %cst_27 = arith.constant dense<0xFF800000> : vector<8xf32>
    %85 = vector.multi_reduction <maximumf>, %84, %cst_27 [1] : vector<8x8xf32> to vector<8xf32>
    %86 = vector.shape_cast %85 : vector<8xf32> to vector<8x1xf32>
    %87 = vector.broadcast %86 : vector<8x1xf32> to vector<8x8xf32>
    %88 = arith.subf %84, %87 : vector<8x8xf32>
    %89 = math.exp %88 : vector<8x8xf32>
    %cst_28 = arith.constant dense<0.000000e+00> : vector<8xf32>
    %90 = vector.multi_reduction <add>, %89, %cst_28 [1] : vector<8x8xf32> to vector<8xf32>
    %91 = vector.shape_cast %90 : vector<8xf32> to vector<8x1xf32>
    %92 = tpu.reciprocal %91 {approx = true} : vector<8x1xf32> -> vector<8x1xf32>
    %93 = vector.broadcast %92 : vector<8x1xf32> to vector<8x8xf32>
    %94 = arith.mulf %89, %93 : vector<8x8xf32>
    %95 = arith.addf %74, %94 : vector<8x8xf32>
    %96 = arith.truncf %94 : vector<8x8xf32> to vector<8x8xbf16>
    %97 = vector.extract_strided_slice %16 {offsets = [0, 24], sizes = [8, 8], strides = [1, 1]} : vector<8x32xbf16> to vector<8x8xbf16>
    %cst_29 = arith.constant dense<0.000000e+00> : vector<8x8xf32>
    %98 = tpu.matmul %96, %97, %cst_29 {dimension_numbers = #tpu.dot_dimension_numbers<[1], [0], [0], [1], [0, 0, 1, 1], [], []>} : vector<8x8xbf16>, vector<8x8xbf16>, vector<8x8xf32> -> vector<8x8xf32>
    %99 = arith.truncf %98 : vector<8x8xf32> to vector<8x8xbf16>
    %100 = vector.extract_strided_slice %4 {offsets = [24, 0], sizes = [8, 1], strides = [1, 1]} : vector<32x1xbf16> to vector<8x1xbf16>
    %cst_30 = arith.constant dense<0.000000e+00> : vector<8x1xf32>
    %101 = tpu.matmul %99, %100, %cst_30 {dimension_numbers = #tpu.dot_dimension_numbers<[1], [0], [0], [1], [0, 0, 1, 1], [], []>} : vector<8x8xbf16>, vector<8x1xbf16>, vector<8x1xf32> -> vector<8x1xf32>
    %102 = arith.addf %81, %101 : vector<8x1xf32>
    %103 = arith.extf %5 : vector<1x1xbf16> to vector<1x1xf32>
    %104 = vector.broadcast %103 : vector<1x1xf32> to vector<8x1xf32>
    %105 = arith.addf %102, %104 : vector<8x1xf32>
    %c0_31 = arith.constant 0 : index
    %c0_32 = arith.constant 0 : index
    %c0_33 = arith.constant 0 : index
    %106 = vector.load %arg4[%c0_31, %c0_32, %c0_33] : memref<1x8x1xf32, #tpu.memory_space<vmem>>, vector<1x8x1xf32>
    %107 = vector.shape_cast %106 : vector<1x8x1xf32> to vector<8x1xf32>
    %108 = vector.shape_cast %105 : vector<8x1xf32> to vector<1x8x1xf32>
    tpu.vector_store %arg4[%c0_31, %c0_32, %c0_33], %108 {strides = array<i32>} : memref<1x8x1xf32, #tpu.memory_space<vmem>>, vector<1x8x1xf32>,
    %cst_34 = arith.constant 2.500000e-01 : f32
    %109 = vector.broadcast %cst_34 : f32 to vector<8x8xf32>
    %110 = arith.mulf %95, %109 : vector<8x8xf32>
    %c0_35 = arith.constant 0 : index
    %c0_36 = arith.constant 0 : index
    %c0_37 = arith.constant 0 : index
    %111 = vector.load %arg5[%c0_35, %c0_36, %c0_37] : memref<1x8x8xf32, #tpu.memory_space<vmem>>, vector<1x8x8xf32>
    %112 = vector.shape_cast %111 : vector<1x8x8xf32> to vector<8x8xf32>
    %113 = vector.shape_cast %110 : vector<8x8xf32> to vector<1x8x8xf32>
    tpu.vector_store %arg5[%c0_35, %c0_36, %c0_37], %113 {strides = array<i32>} : memref<1x8x8xf32, #tpu.memory_space<vmem>>, vector<1x8x8xf32>,
    return
  }
  func.func @transform_0(%arg0: i32) -> (i32, i32, i32) {
    %c0_i32 = arith.constant 0 : i32
    %c0_i32_0 = arith.constant 0 : i32
    %c0_i32_1 = arith.constant 0 : i32
    return %arg0, %c0_i32, %c0_i32_0 : i32, i32, i32
  }
  func.func @transform_1(%arg0: i32) -> (i32, i32) {
    %c0_i32 = arith.constant 0 : i32
    %c0_i32_0 = arith.constant 0 : i32
    %c0_i32_1 = arith.constant 0 : i32
    return %c0_i32, %c0_i32_0 : i32, i32
  }
  func.func @transform_2(%arg0: i32) -> (i32, i32) {
    %c0_i32 = arith.constant 0 : i32
    %c0_i32_0 = arith.constant 0 : i32
    %c0_i32_1 = arith.constant 0 : i32
    return %c0_i32, %c0_i32_0 : i32, i32
  }
  func.func @transform_3(%arg0: i32) -> (i32, i32, i32) {
    %c0_i32 = arith.constant 0 : i32
    %c0_i32_0 = arith.constant 0 : i32
    %c0_i32_1 = arith.constant 0 : i32
    return %arg0, %c0_i32, %c0_i32_0 : i32, i32, i32
  }
  func.func @transform_4(%arg0: i32) -> (i32, i32, i32) {
    %c0_i32 = arith.constant 0 : i32
    %c0_i32_0 = arith.constant 0 : i32
    %c0_i32_1 = arith.constant 0 : i32
    return %arg0, %c0_i32, %c0_i32_0 : i32, i32, i32
  }
}

</mosaic_0001>

<llo_original>
// kernel: attention_model_pallas.1
$region0: #{attention_model_pallas.1}
  #allocation0 [shape = 'u32[]', space=smem, size = 0x4, offset = 0x4, fixed_abs, tag = 'smem constant byte address 0x4 - core index']
  #allocation1 [shape = 'u32[144,128]{1,0:T(1,128)}', space=vmem, size = 0x12000, scoped, tag = 'internal scratch']
  %s0 = inlined_call_operand.hbm [shape: f32[2,8,32], index: 0, kind: input, shape index: {}]
  %s1 = inlined_call_operand.vmem [shape: bf16[33,96], index: 1, kind: input, shape index: {}]
  %s2 = inlined_call_operand.vmem [shape: bf16[33,1], index: 2, kind: input, shape index: {}]
  %s3 = inlined_call_operand.vmem [shape: f32[2,8,1], index: 3, kind: output, shape index: {0}]
  %s4 = inlined_call_operand.hbm [shape: f32[2,8,8], index: 4, kind: output, shape index: {1}]
  %5 = xla_tuple %s3, %s4
  %s6 = sld [smem:[#allocation0]]
  $region57: #{attention_model_pallas.1} parent=0
    _
  %s8 = ssub.s32 1, %s6
  %s9 = scalar_select 0, %s8, %s6
  $region1: #{attention_model_pallas.1} parent=0
    #allocation2 [shape = 'u8[8192]{0}', space=vmem, size = 0x2000, scoped, tag = 'input window, operand 0']
    #allocation3 [shape = 's32[2]{0}', space=sflag, size = 0x8, scoped, tag = 'scoped memory for attention_model_pallas.1']
    #allocation4 [shape = 's32[2]{0}', space=sflag, size = 0x8, scoped, tag = 'scoped memory for attention_model_pallas.1']
    #allocation5 [shape = 'u8[8192]{0}', space=vmem, size = 0x2000, scoped, tag = 'output window, operand 1']
    %10 = vsyncpa [#allocation3], 0
    %s11 = scalar_lea.sflag [#allocation3], 1
    %12 = vsyncpa %s11, 0
    %13 = vsyncpa [#allocation4], 0
    %s14 = scalar_lea.sflag [#allocation4], 1
    %15 = vsyncpa %s14, 0
    loop: start=0, step=1, limit=4
    $region2: #{attention_model_pallas.1} parent=1 // loop_pre_header
      _
    $region3: #{attention_model_pallas.1} parent=1 // loop_header
      %s17 = sphi 0, %s21
      %p18 = scmp.ge.s32.totalorder %s17, 4
      %s27 = sphi 0, %s29
      %s30 = sphi 0, %s27
      %s31 = sphi 0, %s30
      %s47 = sphi 0, %s31
      %s51 = sphi 0, %s51
      %s53 = sphi 0, %s51
      %s54 = sphi 0, %s53
      %s68 = sphi 0, %s54
      %s72 = sphi 0, %s72
      %s74 = sphi 0, %s72
      %s75 = sphi 0, %s74
      %s89 = sphi 0, %s75
      %s95 = sphi 0, %s97
      %s98 = sphi 0, %s95
      %s99 = sphi 0, %s98
      %s115 = sphi 0, %s99
      %s121 = sphi 0, %s123
      %s124 = sphi 0, %s121
      %s125 = sphi 0, %s124
      %s141 = sphi 0, %s125
    $region4: #{attention_model_pallas.1} parent=1 // loop_header_branch
      %20 = sbr.rel (%p18) target = $region8
    $region5: #{attention_model_pallas.1} parent=1 // loop_body
      %s22 = ssub.s32 %s17, 1
      %s23 = ssub.s32 %s17, 2
      %s24 = sadd.s32 %s17, 1
      %s25 = ssub.s32 %s17, %s24
      %p26 = scmp.eq.s32.totalorder %s25, 0
      %s28 = sadd.s32 %s27, 1
      %s29 = scalar_select %p26, %s27, %s28
      %p32 = pneg %p26
      %p33 = scmp.eq.s32.totalorder %s17, 1
      %p34 = por %p32, %p33
      %p35 = scmp.ne.s32.totalorder %s27, %s30
      %p36 = scmp.eq.s32.totalorder %s17, 0
      %p37 = por %p35, %p36
      %p38 = scmp.ne.s32.totalorder %s27, %s30
      %p39 = scmp.eq.s32.totalorder %s22, 1
      %p40 = por %p38, %p39
      %p41 = scmp.ne.s32.totalorder %s30, %s31
      %p42 = scmp.eq.s32.totalorder %s22, 0
      %p43 = por %p41, %p42
      %p44 = scmp.ne.s32.totalorder %s30, %s31
      %p45 = scmp.eq.s32.totalorder %s23, 1
      %p46 = por %p44, %p45
      %p48 = scmp.ne.s32.totalorder %s31, %s47
      %p49 = scmp.eq.s32.totalorder %s23, 0
      %p50 = por %p48, %p49
      %s52 = sadd.s32 %s51, 1
      %p55 = scmp.eq.s32.totalorder %s17, 1
      %p56 = scmp.ne.s32.totalorder %s51, %s53
      %p57 = scmp.eq.s32.totalorder %s17, 0
      %p58 = por %p56, %p57
      %p59 = scmp.ne.s32.totalorder %s51, %s53
      %p60 = scmp.eq.s32.totalorder %s22, 1
      %p61 = por %p59, %p60
      %p62 = scmp.ne.s32.totalorder %s53, %s54
      %p63 = scmp.eq.s32.totalorder %s22, 0
      %p64 = por %p62, %p63
      %p65 = scmp.ne.s32.totalorder %s53, %s54
      %p66 = scmp.eq.s32.totalorder %s23, 1
      %p67 = por %p65, %p66
      %p69 = scmp.ne.s32.totalorder %s54, %s68
      %p70 = scmp.eq.s32.totalorder %s23, 0
      %p71 = por %p69, %p70
      %s73 = sadd.s32 %s72, 1
      %p76 = scmp.eq.s32.totalorder %s17, 1
      %p77 = scmp.ne.s32.totalorder %s72, %s74
      %p78 = scmp.eq.s32.totalorder %s17, 0
      %p79 = por %p77, %p78
      %p80 = scmp.ne.s32.totalorder %s72, %s74
      %p81 = scmp.eq.s32.totalorder %s22, 1
      %p82 = por %p80, %p81
      %p83 = scmp.ne.s32.totalorder %s74, %s75
      %p84 = scmp.eq.s32.totalorder %s22, 0
      %p85 = por %p83, %p84
      %p86 = scmp.ne.s32.totalorder %s74, %s75
      %p87 = scmp.eq.s32.totalorder %s23, 1
      %p88 = por %p86, %p87
      %p90 = scmp.ne.s32.totalorder %s75, %s89
      %p91 = scmp.eq.s32.totalorder %s23, 0
      %p92 = por %p90, %p91
      %s93 = ssub.s32 %s17, %s24
      %p94 = scmp.eq.s32.totalorder %s93, 0
      %s96 = sadd.s32 %s95, 1
      %s97 = scalar_select %p94, %s95, %s96
      %p100 = pneg %p94
      %p101 = scmp.eq.s32.totalorder %s17, 1
      %p102 = por %p100, %p101
      %p103 = scmp.ne.s32.totalorder %s95, %s98
      %p104 = scmp.eq.s32.totalorder %s17, 0
      %p105 = por %p103, %p104
      %p106 = scmp.ne.s32.totalorder %s95, %s98
      %p107 = scmp.eq.s32.totalorder %s22, 1
      %p108 = por %p106, %p107
      %p109 = scmp.ne.s32.totalorder %s98, %s99
      %p110 = scmp.eq.s32.totalorder %s22, 0
      %p111 = por %p109, %p110
      %p112 = scmp.ne.s32.totalorder %s98, %s99
      %p113 = scmp.eq.s32.totalorder %s23, 1
      %p114 = por %p112, %p113
      %p116 = scmp.ne.s32.totalorder %s99, %s115
      %p117 = scmp.eq.s32.totalorder %s23, 0
      %p118 = por %p116, %p117
      %s119 = ssub.s32 %s17, %s24
      %p120 = scmp.eq.s32.totalorder %s119, 0
      %s122 = sadd.s32 %s121, 1
      %s123 = scalar_select %p120, %s121, %s122
      %p126 = pneg %p120
      %p127 = scmp.eq.s32.totalorder %s17, 1
      %p128 = por %p126, %p127
      %p129 = scmp.ne.s32.totalorder %s121, %s124
      %p130 = scmp.eq.s32.totalorder %s17, 0
      %p131 = por %p129, %p130
      %p132 = scmp.ne.s32.totalorder %s121, %s124
      %p133 = scmp.eq.s32.totalorder %s22, 1
      %p134 = por %p132, %p133
      %p135 = scmp.ne.s32.totalorder %s124, %s125
      %p136 = scmp.eq.s32.totalorder %s22, 0
      %p137 = por %p135, %p136
      %p138 = scmp.ne.s32.totalorder %s124, %s125
      %p139 = scmp.eq.s32.totalorder %s23, 1
      %p140 = por %p138, %p139
      %p142 = scmp.ne.s32.totalorder %s125, %s141
      %p143 = scmp.eq.s32.totalorder %s23, 0
      %p144 = por %p142, %p143
      %p145 = scmp.le.s32.totalorder 1, %s17
      %p146 = scmp.lt.s32.totalorder %s17, 3
      %p147 = pnand %p145, %p146
      %p148 = pneg %p147
      // Predicated region
      $region9: #{attention_model_pallas.1} parent=5 // pred_check
        _
      $region10: #{attention_model_pallas.1} parent=5 // pred_check_branch
        %150 = sbr.rel (%p147) target = $region12
      $region11: #{attention_model_pallas.1} parent=5 // pred_region
        %s151 = ssub.s32 %s17, 1
        // Predicated region
        $region13: #{attention_model_pallas.1} parent=11 // pred_check
          %p152 = pneg %p64
        $region14: #{attention_model_pallas.1} parent=11 // pred_check_branch
          %154 = sbr.rel (%p152) target = $region16
        $region15: #{attention_model_pallas.1} parent=11 // pred_region
          _
        $region16: #{attention_model_pallas.1} parent=11 // pred_fallthru
          _
        // Predicated region
        $region17: #{attention_model_pallas.1} parent=11 // pred_check
          %p155 = pneg %p85
        $region18: #{attention_model_pallas.1} parent=11 // pred_check_branch
          %157 = sbr.rel (%p155) target = $region20
        $region19: #{attention_model_pallas.1} parent=11 // pred_region
          _
        $region20: #{attention_model_pallas.1} parent=11 // pred_fallthru
          _
      $region12: #{attention_model_pallas.1} parent=5 // pred_fallthru
        _
      %p158 = scmp.lt.s32.totalorder %s17, 2
      // Predicated region
      $region21: #{attention_model_pallas.1} parent=5 // pred_check
        %p159 = pneg %p158
      $region22: #{attention_model_pallas.1} parent=5 // pred_check_branch
        %161 = sbr.rel (%p159) target = $region24
      $region23: #{attention_model_pallas.1} parent=5 // pred_region
        // Predicated region
        $region25: #{attention_model_pallas.1} parent=23 // pred_check
          %p162 = pneg %p37
        $region26: #{attention_model_pallas.1} parent=23 // pred_check_branch
          %164 = sbr.rel (%p162) target = $region28
        $region27: #{attention_model_pallas.1} parent=23 // pred_region
          %s165 = sand.u32 %s27, 1
          %s166 = scalar_lea.sflag [#allocation3], %s165
          %s167 = sand.u32 %s27, 1
          %s168 = smul.addr %s167, 8
          %s169 = scalar_lea.vmem [#allocation2], %s168
          %s171 = ssub.s32 128, 128
          %172 = vsyncadd %s166, %s171
          %s173 = smul.addr %s17, 128
          %s174 = scalar_lea.hbm %s0, %s173
          %s176 = sshll.u32 %s169, 4
          %s177 = int_to_ptr.vmem [resolvable:$true] %s176
          %179 = dma.hbm_to_vmem [thread:$0]  %s174, 128, %s177, %s166
        $region28: #{attention_model_pallas.1} parent=23 // pred_fallthru
          _
      $region24: #{attention_model_pallas.1} parent=5 // pred_fallthru
        _
      %p180 = scmp.le.s32.totalorder 1, %s17
      %p181 = scmp.lt.s32.totalorder %s17, 3
      %p182 = pnand %p180, %p181
      %p183 = pneg %p182
      // Predicated region
      $region29: #{attention_model_pallas.1} parent=5 // pred_check
        _
      $region30: #{attention_model_pallas.1} parent=5 // pred_check_branch
        %185 = sbr.rel (%p182) target = $region32
      $region31: #{attention_model_pallas.1} parent=5 // pred_region
        %s186 = ssub.s32 %s17, 1
        %s187 = sand.u32 %s30, 1
        %s188 = scalar_lea.sflag [#allocation3], %s187
        %s189 = sand.u32 %s30, 1
        %s190 = smul.addr %s189, 8
        %s191 = scalar_lea.vmem [#allocation2], %s190
        // Predicated region
        $region33: #{attention_model_pallas.1} parent=31 // pred_check
          %p192 = pneg %p43
        $region34: #{attention_model_pallas.1} parent=31 // pred_check_branch
          %194 = sbr.rel (%p192) target = $region36
        $region35: #{attention_model_pallas.1} parent=31 // pred_region
          %195 = dma.done %s188, 128
        $region36: #{attention_model_pallas.1} parent=31 // pred_fallthru
          _
        %s196 = sand.u32 %s30, 1
        %s197 = scalar_lea.sflag [#allocation3], %s196
        %s198 = sand.u32 %s30, 1
        %s199 = smul.addr %s198, 8
        %s200 = scalar_lea.vmem [#allocation2], %s199
        %p201 = pneg %p43
        %p202 = pneg %p40
        %p203 = pneg %p64
        %p204 = pneg %p61
        %p205 = pneg %p85
        %p206 = pneg %p82
        %p207 = pneg %p111
        %p208 = pneg %p108
        %p209 = scmp.lt.s32.totalorder %s22, 1
        %s210 = scalar_select %p209, %s22, 1
        %s211 = smul.addr %s210, 8
        %s212 = scalar_lea.vmem %s3, %s211
        %p213 = pneg %p137
        %p214 = pneg %p134
        %s215 = sand.u32 %s124, 1
        %s216 = scalar_lea.sflag [#allocation4], %s215
        %s217 = sand.u32 %s124, 1
        %s218 = smul.addr %s217, 8
        %s219 = scalar_lea.vmem [#allocation5], %s218
        %p220 = scmp.lt.s32.totalorder %s22, 1
        %s221 = scalar_select %p220, %s22, 1
        %s222 = smul.addr %s221, 8
        %s223 = scalar_lea.vmem %s3, %s222
        %v225 = vld [vmem:[%s191] sm:$0xff]
        %v226 = vld [vmem:[%s1] sm:$0xf]
        %v227 = vld [vmem:[%s1 + $0x4] sm:$0xf]
        %v228 = vld [vmem:[%s1 + $0x8] sm:$0xf]
        %v229 = vld [vmem:[%s1 + $0xc] sm:$0xf]
        %v230 = vld [vmem:[%s1 + $0x10] sm:$0x1]
        %v231 = vld [vmem:[%s2] sm:$0xf]
        %v232 = vld [vmem:[%s2 + $0x4] sm:$0xf]
        %v233 = vld [vmem:[%s2 + $0x8] sm:$0xf]
        %v234 = vld [vmem:[%s2 + $0xc] sm:$0xf]
        %v235 = vld [vmem:[%s2 + $0x10] sm:$0x1]
        %v236 = vpack.c.bf16 %v225, %v225
        %v237 = vunpack.c.l.bf16 %v230
        %v238 = vlaneseq
        %v239 = vshrl.u32 %v238, 7
        %v240 = vsub.s32 0, %v239
        %v241 = vrot.slane %v237, %v240
        %v246 = vunpack.c.l.b16 %v226
        %v247 = vunpack.c.l.b16 %v227
        %v248 = vunpack.c.l.b16 %v228
        %v249 = vunpack.c.l.b16 %v229
        %v250 = vpack.c.b16 %v247, %v246
        %v251 = vpack.c.b16 %v249, %v248
        %vm254 = vcmask 261120
        %v256 = vsel %vm254, %v236, 0
        %258 = vmatprep.subr.bf16.mxu0 0
        %259 = vmatpush1.bf16.msra.mxu0 0
        %260 = vmatprep.subr.bf16.mxu0 0
        %261 = vmatpush1.bf16.msra.mxu0 0
        %262 = vmatprep.subr.bf16.mxu0 0
        %263 = vmatpush1.bf16.msra.mxu0 0
        %264 = vmatprep.subr.bf16.mxu0 0
        %265 = vmatpush1.bf16.msra.mxu0 0
        %266 = vmatprep.subr.bf16.mxu0 0
        %267 = vmatpush1.bf16.msra.mxu0 0
        %268 = vmatprep.subr.bf16.mxu0 0
        %269 = vmatpush1.bf16.msra.mxu0 0
        %270 = vmatprep.subr.bf16.mxu0 0
        %271 = vmatpush1.bf16.msra.mxu0 %v251
        %272 = vmatprep.subr.bf16.mxu0 0
        %273 = vmatpush1.bf16.msra.mxu0 %v250
        %274 = vmatprep.subr.bf16.mxu0 0
        %275 = vmatpush2.bf16.msra.mxu0 0
        %276 = vmatprep.subr.bf16.mxu0 0
        %277 = vmatpush2.bf16.msra.mxu0 0
        %278 = vmatprep.subr.bf16.mxu0 0
        %279 = vmatpush2.bf16.msra.mxu0 0
        %280 = vmatprep.subr.bf16.mxu0 0
        %281 = vmatpush2.bf16.msra.mxu0 0
        %282 = vmatprep.subr.bf16.mxu0 0
        %283 = vmatpush2.bf16.msra.mxu0 0
        %284 = vmatprep.subr.bf16.mxu0 0
        %285 = vmatpush2.bf16.msra.mxu0 0
        %286 = vmatprep.subr.bf16.mxu0 0
        %287 = vmatpush2.bf16.msra.mxu0 0
        %288 = vmatprep.subr.bf16.mxu0 0
        %289 = vmatpush2.bf16.msra.mxu0 0
        %290 = vmatprep.mubr.bf16.mxu0 0
        %291 = vmatmul.mubr.bf16.gmra.mxu0 %v256
        %v292 = vpop.f32.mrf.mxu0
        %v293 = vadd.f32 %v241, %v292
        %v294 = vpop.f32.mrf.mxu0
        %v295 = vpop.f32.mrf.mxu0
        %v296 = vpop.f32.mrf.mxu0
        %297 = vdwg.mxu0
        %v298 = vpack.c.bf16 %v293, %v293
        %300 = vrot.lane.b32.xlu0 %v298, 96
        %v301 = vpop.permute.xlu0 %300
        %vm302 = vcmask 64512
        %v304 = vsel %vm302, %v298, 0
        %v307 = vsel %vm302, %v301, 0
        %309 = vmatprep.subr.bf16.mxu0 0
        %310 = vmatpush1.bf16.xpose.msra.mxu0 0
        %311 = vmatprep.subr.bf16.mxu0 0
        %312 = vmatpush1.bf16.xpose.msra.mxu0 0
        %313 = vmatprep.subr.bf16.mxu0 0
        %314 = vmatpush1.bf16.xpose.msra.mxu0 0
        %315 = vmatprep.subr.bf16.mxu0 0
        %316 = vmatpush1.bf16.xpose.msra.mxu0 0
        %317 = vmatprep.subr.bf16.mxu0 0
        %318 = vmatpush1.bf16.xpose.msra.mxu0 0
        %319 = vmatprep.subr.bf16.mxu0 0
        %320 = vmatpush1.bf16.xpose.msra.mxu0 0
        %321 = vmatprep.subr.bf16.mxu0 0
        %322 = vmatpush1.bf16.xpose.msra.mxu0 0
        %323 = vmatprep.subr.bf16.mxu0 0
        %324 = vmatpush1.bf16.xpose.msra.mxu0 %v307
        %325 = vmatprep.subr.bf16.mxu0 0
        %326 = vmatpush2.bf16.xpose.msra.mxu0 0
        %327 = vmatprep.subr.bf16.mxu0 0
        %328 = vmatpush2.bf16.xpose.msra.mxu0 0
        %329 = vmatprep.subr.bf16.mxu0 0
        %330 = vmatpush2.bf16.xpose.msra.mxu0 0
        %331 = vmatprep.subr.bf16.mxu0 0
        %332 = vmatpush2.bf16.xpose.msra.mxu0 0
        %333 = vmatprep.subr.bf16.mxu0 0
        %334 = vmatpush2.bf16.xpose.msra.mxu0 0
        %335 = vmatprep.subr.bf16.mxu0 0
        %336 = vmatpush2.bf16.xpose.msra.mxu0 0
        %337 = vmatprep.subr.bf16.mxu0 0
        %338 = vmatpush2.bf16.xpose.msra.mxu0 0
        %339 = vmatprep.subr.bf16.mxu0 0
        %340 = vmatpush2.bf16.xpose.msra.mxu0 0
        %341 = vmatprep.mubr.bf16.mxu0 0
        %342 = vmatmul.mubr.bf16.gmra.mxu0 %v304
        %v343 = vpop.f32.mrf.mxu0
        %v344 = vadd.f32 0.0, %v343
        %v345 = vpop.f32.mrf.mxu0
        %v346 = vpop.f32.mrf.mxu0
        %v347 = vpop.f32.mrf.mxu0
        %348 = vdwg.mxu0
        %v349 = vsel %vm302, %v344, -inf
        %350 = vmax.xlane.f32.xlu0 %v349
        %v351 = vpop.xlane.xlu0 %350
        %v352 = vsub.f32 %v344, %v351
        %v353 = vmul.f32 %v352, 1.442695
        %v354 = vpow.pop %v353
        %v355 = vsel %vm302, %v354, 0.0
        %356 = vadd.xlane.f32.xlu0 %v355
        %v357 = vpop.xlane.xlu0 %356
        %v358 = vrcp.pop %v357
        %v359 = vmul.f32 %v354, %v358
        %v360 = vadd.f32 %v359, 0.0
        %v361 = vpack.c.bf16 %v359, %v359
        %362 = vrot.lane.b32.xlu0 %v298, 64
        %v363 = vpop.permute.xlu0 %362
        %v365 = vsel %vm302, %v361, 0
        %vm367 = vcmask 1043456
        %v369 = vsel %vm367, %v363, 0
        %371 = vmatprep.subr.bf16.mxu0 0
        %372 = vmatpush1.bf16.msra.mxu0 0
        %373 = vmatprep.subr.bf16.mxu0 0
        %374 = vmatpush1.bf16.msra.mxu0 0
        %375 = vmatprep.subr.bf16.mxu0 0
        %376 = vmatpush1.bf16.msra.mxu0 0
        %377 = vmatprep.subr.bf16.mxu0 0
        %378 = vmatpush1.bf16.msra.mxu0 0
        %379 = vmatprep.subr.bf16.mxu0 0
        %380 = vmatpush1.bf16.msra.mxu0 0
        %381 = vmatprep.subr.bf16.mxu0 0
        %382 = vmatpush1.bf16.msra.mxu0 0
        %383 = vmatprep.subr.bf16.mxu0 0
        %384 = vmatpush1.bf16.msra.mxu0 0
        %385 = vmatprep.subr.bf16.mxu0 0
        %386 = vmatpush1.bf16.msra.mxu0 %v369
        %387 = vmatprep.subr.bf16.mxu0 0
        %388 = vmatpush2.bf16.msra.mxu0 0
        %389 = vmatprep.subr.bf16.mxu0 0
        %390 = vmatpush2.bf16.msra.mxu0 0
        %391 = vmatprep.subr.bf16.mxu0 0
        %392 = vmatpush2.bf16.msra.mxu0 0
        %393 = vmatprep.subr.bf16.mxu0 0
        %394 = vmatpush2.bf16.msra.mxu0 0
        %395 = vmatprep.subr.bf16.mxu0 0
        %396 = vmatpush2.bf16.msra.mxu0 0
        %397 = vmatprep.subr.bf16.mxu0 0
        %398 = vmatpush2.bf16.msra.mxu0 0
        %399 = vmatprep.subr.bf16.mxu0 0
        %400 = vmatpush2.bf16.msra.mxu0 0
        %401 = vmatprep.subr.bf16.mxu0 0
        %402 = vmatpush2.bf16.msra.mxu0 0
        %403 = vmatprep.mubr.bf16.mxu0 0
        %404 = vmatmul.mubr.bf16.gmra.mxu0 %v365
        %v405 = vpop.f32.mrf.mxu0
        %v406 = vadd.f32 0.0, %v405
        %v407 = vpop.f32.mrf.mxu0
        %v408 = vpop.f32.mrf.mxu0
        %v409 = vpop.f32.mrf.mxu0
        %410 = vdwg.mxu0
        %v411 = vpack.c.bf16 %v406, %v406
        %412 = vrot.lane.b32.xlu0 %v298, 120
        %v413 = vpop.permute.xlu0 %412
        %414 = vrot.lane.b32.xlu0 %v298, 88
        %v415 = vpop.permute.xlu0 %414
        %v417 = vsel %vm302, %v413, 0
        %v420 = vsel %vm302, %v415, 0
        %422 = vmatprep.subr.bf16.mxu0 0
        %423 = vmatpush1.bf16.xpose.msra.mxu0 0
        %424 = vmatprep.subr.bf16.mxu0 0
        %425 = vmatpush1.bf16.xpose.msra.mxu0 0
        %426 = vmatprep.subr.bf16.mxu0 0
        %427 = vmatpush1.bf16.xpose.msra.mxu0 0
        %428 = vmatprep.subr.bf16.mxu0 0
        %429 = vmatpush1.bf16.xpose.msra.mxu0 0
        %430 = vmatprep.subr.bf16.mxu0 0
        %431 = vmatpush1.bf16.xpose.msra.mxu0 0
        %432 = vmatprep.subr.bf16.mxu0 0
        %433 = vmatpush1.bf16.xpose.msra.mxu0 0
        %434 = vmatprep.subr.bf16.mxu0 0
        %435 = vmatpush1.bf16.xpose.msra.mxu0 0
        %436 = vmatprep.subr.bf16.mxu0 0
        %437 = vmatpush1.bf16.xpose.msra.mxu0 %v420
        %438 = vmatprep.subr.bf16.mxu0 0
        %439 = vmatpush2.bf16.xpose.msra.mxu0 0
        %440 = vmatprep.subr.bf16.mxu0 0
        %441 = vmatpush2.bf16.xpose.msra.mxu0 0
        %442 = vmatprep.subr.bf16.mxu0 0
        %443 = vmatpush2.bf16.xpose.msra.mxu0 0
        %444 = vmatprep.subr.bf16.mxu0 0
        %445 = vmatpush2.bf16.xpose.msra.mxu0 0
        %446 = vmatprep.subr.bf16.mxu0 0
        %447 = vmatpush2.bf16.xpose.msra.mxu0 0
        %448 = vmatprep.subr.bf16.mxu0 0
        %449 = vmatpush2.bf16.xpose.msra.mxu0 0
        %450 = vmatprep.subr.bf16.mxu0 0
        %451 = vmatpush2.bf16.xpose.msra.mxu0 0
        %452 = vmatprep.subr.bf16.mxu0 0
        %453 = vmatpush2.bf16.xpose.msra.mxu0 0
        %454 = vmatprep.mubr.bf16.mxu0 0
        %455 = vmatmul.mubr.bf16.gmra.mxu0 %v417
        %v456 = vpop.f32.mrf.mxu0
        %v457 = vadd.f32 0.0, %v456
        %v458 = vpop.f32.mrf.mxu0
        %v459 = vpop.f32.mrf.mxu0
        %v460 = vpop.f32.mrf.mxu0
        %461 = vdwg.mxu0
        %v462 = vsel %vm302, %v457, -inf
        %463 = vmax.xlane.f32.xlu0 %v462
        %v464 = vpop.xlane.xlu0 %463
        %v465 = vsub.f32 %v457, %v464
        %v466 = vmul.f32 %v465, 1.442695
        %v467 = vpow.pop %v466
        %v468 = vsel %vm302, %v467, 0.0
        %469 = vadd.xlane.f32.xlu0 %v468
        %v470 = vpop.xlane.xlu0 %469
        %v471 = vrcp.pop %v470
        %v472 = vmul.f32 %v467, %v471
        %v473 = vadd.f32 %v360, %v472
        %v474 = vpack.c.bf16 %v472, %v472
        %475 = vrot.lane.b32.xlu0 %v298, 56
        %v476 = vpop.permute.xlu0 %475
        %v478 = vsel %vm302, %v474, 0
        %v481 = vsel %vm367, %v476, 0
        %483 = vmatprep.subr.bf16.mxu0 0
        %484 = vmatpush1.bf16.msra.mxu0 0
        %485 = vmatprep.subr.bf16.mxu0 0
        %486 = vmatpush1.bf16.msra.mxu0 0
        %487 = vmatprep.subr.bf16.mxu0 0
        %488 = vmatpush1.bf16.msra.mxu0 0
        %489 = vmatprep.subr.bf16.mxu0 0
        %490 = vmatpush1.bf16.msra.mxu0 0
        %491 = vmatprep.subr.bf16.mxu0 0
        %492 = vmatpush1.bf16.msra.mxu0 0
        %493 = vmatprep.subr.bf16.mxu0 0
        %494 = vmatpush1.bf16.msra.mxu0 0
        %495 = vmatprep.subr.bf16.mxu0 0
        %496 = vmatpush1.bf16.msra.mxu0 0
        %497 = vmatprep.subr.bf16.mxu0 0
        %498 = vmatpush1.bf16.msra.mxu0 %v481
        %499 = vmatprep.subr.bf16.mxu0 0
        %500 = vmatpush2.bf16.msra.mxu0 0
        %501 = vmatprep.subr.bf16.mxu0 0
        %502 = vmatpush2.bf16.msra.mxu0 0
        %503 = vmatprep.subr.bf16.mxu0 0
        %504 = vmatpush2.bf16.msra.mxu0 0
        %505 = vmatprep.subr.bf16.mxu0 0
        %506 = vmatpush2.bf16.msra.mxu0 0
        %507 = vmatprep.subr.bf16.mxu0 0
        %508 = vmatpush2.bf16.msra.mxu0 0
        %509 = vmatprep.subr.bf16.mxu0 0
        %510 = vmatpush2.bf16.msra.mxu0 0
        %511 = vmatprep.subr.bf16.mxu0 0
        %512 = vmatpush2.bf16.msra.mxu0 0
        %513 = vmatprep.subr.bf16.mxu0 0
        %514 = vmatpush2.bf16.msra.mxu0 0
        %515 = vmatprep.mubr.bf16.mxu0 0
        %516 = vmatmul.mubr.bf16.gmra.mxu0 %v478
        %v517 = vpop.f32.mrf.mxu0
        %v518 = vadd.f32 0.0, %v517
        %v519 = vpop.f32.mrf.mxu0
        %v520 = vpop.f32.mrf.mxu0
        %v521 = vpop.f32.mrf.mxu0
        %522 = vdwg.mxu0
        %v523 = vpack.c.bf16 %v518, %v518
        %v525 = vsel %vm302, %v523, 0
        %v528 = vsel %vm367, %v232, 0
        %530 = vmatprep.subr.bf16.mxu0 0
        %531 = vmatpush1.bf16.msra.mxu0 0
        %532 = vmatprep.subr.bf16.mxu0 0
        %533 = vmatpush1.bf16.msra.mxu0 0
        %534 = vmatprep.subr.bf16.mxu0 0
        %535 = vmatpush1.bf16.msra.mxu0 0
        %536 = vmatprep.subr.bf16.mxu0 0
        %537 = vmatpush1.bf16.msra.mxu0 0
        %538 = vmatprep.subr.bf16.mxu0 0
        %539 = vmatpush1.bf16.msra.mxu0 0
        %540 = vmatprep.subr.bf16.mxu0 0
        %541 = vmatpush1.bf16.msra.mxu0 0
        %542 = vmatprep.subr.bf16.mxu0 0
        %543 = vmatpush1.bf16.msra.mxu0 0
        %544 = vmatprep.subr.bf16.mxu0 0
        %545 = vmatpush1.bf16.msra.mxu0 %v528
        %546 = vmatprep.subr.bf16.mxu0 0
        %547 = vmatpush2.bf16.msra.mxu0 0
        %548 = vmatprep.subr.bf16.mxu0 0
        %549 = vmatpush2.bf16.msra.mxu0 0
        %550 = vmatprep.subr.bf16.mxu0 0
        %551 = vmatpush2.bf16.msra.mxu0 0
        %552 = vmatprep.subr.bf16.mxu0 0
        %553 = vmatpush2.bf16.msra.mxu0 0
        %554 = vmatprep.subr.bf16.mxu0 0
        %555 = vmatpush2.bf16.msra.mxu0 0
        %556 = vmatprep.subr.bf16.mxu0 0
        %557 = vmatpush2.bf16.msra.mxu0 0
        %558 = vmatprep.subr.bf16.mxu0 0
        %559 = vmatpush2.bf16.msra.mxu0 0
        %560 = vmatprep.subr.bf16.mxu0 0
        %561 = vmatpush2.bf16.msra.mxu0 0
        %562 = vmatprep.mubr.bf16.mxu0 0
        %563 = vmatmul.mubr.bf16.gmra.mxu0 %v525
        %v564 = vpop.f32.mrf.mxu0
        %v565 = vadd.f32 0.0, %v564
        %v566 = vpop.f32.mrf.mxu0
        %v567 = vpop.f32.mrf.mxu0
        %v568 = vpop.f32.mrf.mxu0
        %569 = vdwg.mxu0
        %v571 = vsel %vm302, %v411, 0
        %v574 = vsel %vm367, %v231, 0
        %576 = vmatprep.subr.bf16.mxu0 0
        %577 = vmatpush1.bf16.msra.mxu0 0
        %578 = vmatprep.subr.bf16.mxu0 0
        %579 = vmatpush1.bf16.msra.mxu0 0
        %580 = vmatprep.subr.bf16.mxu0 0
        %581 = vmatpush1.bf16.msra.mxu0 0
        %582 = vmatprep.subr.bf16.mxu0 0
        %583 = vmatpush1.bf16.msra.mxu0 0
        %584 = vmatprep.subr.bf16.mxu0 0
        %585 = vmatpush1.bf16.msra.mxu0 0
        %586 = vmatprep.subr.bf16.mxu0 0
        %587 = vmatpush1.bf16.msra.mxu0 0
        %588 = vmatprep.subr.bf16.mxu0 0
        %589 = vmatpush1.bf16.msra.mxu0 0
        %590 = vmatprep.subr.bf16.mxu0 0
        %591 = vmatpush1.bf16.msra.mxu0 %v574
        %592 = vmatprep.subr.bf16.mxu0 0
        %593 = vmatpush2.bf16.msra.mxu0 0
        %594 = vmatprep.subr.bf16.mxu0 0
        %595 = vmatpush2.bf16.msra.mxu0 0
        %596 = vmatprep.subr.bf16.mxu0 0
        %597 = vmatpush2.bf16.msra.mxu0 0
        %598 = vmatprep.subr.bf16.mxu0 0
        %599 = vmatpush2.bf16.msra.mxu0 0
        %600 = vmatprep.subr.bf16.mxu0 0
        %601 = vmatpush2.bf16.msra.mxu0 0
        %602 = vmatprep.subr.bf16.mxu0 0
        %603 = vmatpush2.bf16.msra.mxu0 0
        %604 = vmatprep.subr.bf16.mxu0 0
        %605 = vmatpush2.bf16.msra.mxu0 0
        %606 = vmatprep.subr.bf16.mxu0 0
        %607 = vmatpush2.bf16.msra.mxu0 0
        %608 = vmatprep.mubr.bf16.mxu0 0
        %609 = vmatmul.mubr.bf16.gmra.mxu0 %v571
        %v610 = vpop.f32.mrf.mxu0
        %v611 = vadd.f32 %v565, %v610
        %v612 = vpop.f32.mrf.mxu0
        %v613 = vpop.f32.mrf.mxu0
        %v614 = vpop.f32.mrf.mxu0
        %615 = vdwg.mxu0
        %616 = vrot.lane.b32.xlu0 %v298, 112
        %v617 = vpop.permute.xlu0 %616
        %618 = vrot.lane.b32.xlu0 %v298, 80
        %v619 = vpop.permute.xlu0 %618
        %v621 = vsel %vm302, %v617, 0
        %v624 = vsel %vm302, %v619, 0
        %626 = vmatprep.subr.bf16.mxu0 0
        %627 = vmatpush1.bf16.xpose.msra.mxu0 0
        %628 = vmatprep.subr.bf16.mxu0 0
        %629 = vmatpush1.bf16.xpose.msra.mxu0 0
        %630 = vmatprep.subr.bf16.mxu0 0
        %631 = vmatpush1.bf16.xpose.msra.mxu0 0
        %632 = vmatprep.subr.bf16.mxu0 0
        %633 = vmatpush1.bf16.xpose.msra.mxu0 0
        %634 = vmatprep.subr.bf16.mxu0 0
        %635 = vmatpush1.bf16.xpose.msra.mxu0 0
        %636 = vmatprep.subr.bf16.mxu0 0
        %637 = vmatpush1.bf16.xpose.msra.mxu0 0
        %638 = vmatprep.subr.bf16.mxu0 0
        %639 = vmatpush1.bf16.xpose.msra.mxu0 0
        %640 = vmatprep.subr.bf16.mxu0 0
        %641 = vmatpush1.bf16.xpose.msra.mxu0 %v624
        %642 = vmatprep.subr.bf16.mxu0 0
        %643 = vmatpush2.bf16.xpose.msra.mxu0 0
        %644 = vmatprep.subr.bf16.mxu0 0
        %645 = vmatpush2.bf16.xpose.msra.mxu0 0
        %646 = vmatprep.subr.bf16.mxu0 0
        %647 = vmatpush2.bf16.xpose.msra.mxu0 0
        %648 = vmatprep.subr.bf16.mxu0 0
        %649 = vmatpush2.bf16.xpose.msra.mxu0 0
        %650 = vmatprep.subr.bf16.mxu0 0
        %651 = vmatpush2.bf16.xpose.msra.mxu0 0
        %652 = vmatprep.subr.bf16.mxu0 0
        %653 = vmatpush2.bf16.xpose.msra.mxu0 0
        %654 = vmatprep.subr.bf16.mxu0 0
        %655 = vmatpush2.bf16.xpose.msra.mxu0 0
        %656 = vmatprep.subr.bf16.mxu0 0
        %657 = vmatpush2.bf16.xpose.msra.mxu0 0
        %658 = vmatprep.mubr.bf16.mxu0 0
        %659 = vmatmul.mubr.bf16.gmra.mxu0 %v621
        %v660 = vpop.f32.mrf.mxu0
        %v661 = vadd.f32 0.0, %v660
        %v662 = vpop.f32.mrf.mxu0
        %v663 = vpop.f32.mrf.mxu0
        %v664 = vpop.f32.mrf.mxu0
        %665 = vdwg.mxu0
        %v666 = vsel %vm302, %v661, -inf
        %667 = vmax.xlane.f32.xlu0 %v666
        %v668 = vpop.xlane.xlu0 %667
        %v669 = vsub.f32 %v661, %v668
        %v670 = vmul.f32 %v669, 1.442695
        %v671 = vpow.pop %v670
        %v672 = vsel %vm302, %v671, 0.0
        %673 = vadd.xlane.f32.xlu0 %v672
        %v674 = vpop.xlane.xlu0 %673
        %v675 = vrcp.pop %v674
        %v676 = vmul.f32 %v671, %v675
        %v677 = vadd.f32 %v473, %v676
        %v678 = vpack.c.bf16 %v676, %v676
        %679 = vrot.lane.b32.xlu0 %v298, 48
        %v680 = vpop.permute.xlu0 %679
        %v682 = vsel %vm302, %v678, 0
        %v685 = vsel %vm367, %v680, 0
        %687 = vmatprep.subr.bf16.mxu0 0
        %688 = vmatpush1.bf16.msra.mxu0 0
        %689 = vmatprep.subr.bf16.mxu0 0
        %690 = vmatpush1.bf16.msra.mxu0 0
        %691 = vmatprep.subr.bf16.mxu0 0
        %692 = vmatpush1.bf16.msra.mxu0 0
        %693 = vmatprep.subr.bf16.mxu0 0
        %694 = vmatpush1.bf16.msra.mxu0 0
        %695 = vmatprep.subr.bf16.mxu0 0
        %696 = vmatpush1.bf16.msra.mxu0 0
        %697 = vmatprep.subr.bf16.mxu0 0
        %698 = vmatpush1.bf16.msra.mxu0 0
        %699 = vmatprep.subr.bf16.mxu0 0
        %700 = vmatpush1.bf16.msra.mxu0 0
        %701 = vmatprep.subr.bf16.mxu0 0
        %702 = vmatpush1.bf16.msra.mxu0 %v685
        %703 = vmatprep.subr.bf16.mxu0 0
        %704 = vmatpush2.bf16.msra.mxu0 0
        %705 = vmatprep.subr.bf16.mxu0 0
        %706 = vmatpush2.bf16.msra.mxu0 0
        %707 = vmatprep.subr.bf16.mxu0 0
        %708 = vmatpush2.bf16.msra.mxu0 0
        %709 = vmatprep.subr.bf16.mxu0 0
        %710 = vmatpush2.bf16.msra.mxu0 0
        %711 = vmatprep.subr.bf16.mxu0 0
        %712 = vmatpush2.bf16.msra.mxu0 0
        %713 = vmatprep.subr.bf16.mxu0 0
        %714 = vmatpush2.bf16.msra.mxu0 0
        %715 = vmatprep.subr.bf16.mxu0 0
        %716 = vmatpush2.bf16.msra.mxu0 0
        %717 = vmatprep.subr.bf16.mxu0 0
        %718 = vmatpush2.bf16.msra.mxu0 0
        %719 = vmatprep.mubr.bf16.mxu0 0
        %720 = vmatmul.mubr.bf16.gmra.mxu0 %v682
        %v721 = vpop.f32.mrf.mxu0
        %v722 = vadd.f32 0.0, %v721
        %v723 = vpop.f32.mrf.mxu0
        %v724 = vpop.f32.mrf.mxu0
        %v725 = vpop.f32.mrf.mxu0
        %726 = vdwg.mxu0
        %v727 = vpack.c.bf16 %v722, %v722
        %v729 = vsel %vm302, %v727, 0
        %v732 = vsel %vm367, %v233, 0
        %734 = vmatprep.subr.bf16.mxu0 0
        %735 = vmatpush1.bf16.msra.mxu0 0
        %736 = vmatprep.subr.bf16.mxu0 0
        %737 = vmatpush1.bf16.msra.mxu0 0
        %738 = vmatprep.subr.bf16.mxu0 0
        %739 = vmatpush1.bf16.msra.mxu0 0
        %740 = vmatprep.subr.bf16.mxu0 0
        %741 = vmatpush1.bf16.msra.mxu0 0
        %742 = vmatprep.subr.bf16.mxu0 0
        %743 = vmatpush1.bf16.msra.mxu0 0
        %744 = vmatprep.subr.bf16.mxu0 0
        %745 = vmatpush1.bf16.msra.mxu0 0
        %746 = vmatprep.subr.bf16.mxu0 0
        %747 = vmatpush1.bf16.msra.mxu0 0
        %748 = vmatprep.subr.bf16.mxu0 0
        %749 = vmatpush1.bf16.msra.mxu0 %v732
        %750 = vmatprep.subr.bf16.mxu0 0
        %751 = vmatpush2.bf16.msra.mxu0 0
        %752 = vmatprep.subr.bf16.mxu0 0
        %753 = vmatpush2.bf16.msra.mxu0 0
        %754 = vmatprep.subr.bf16.mxu0 0
        %755 = vmatpush2.bf16.msra.mxu0 0
        %756 = vmatprep.subr.bf16.mxu0 0
        %757 = vmatpush2.bf16.msra.mxu0 0
        %758 = vmatprep.subr.bf16.mxu0 0
        %759 = vmatpush2.bf16.msra.mxu0 0
        %760 = vmatprep.subr.bf16.mxu0 0
        %761 = vmatpush2.bf16.msra.mxu0 0
        %762 = vmatprep.subr.bf16.mxu0 0
        %763 = vmatpush2.bf16.msra.mxu0 0
        %764 = vmatprep.subr.bf16.mxu0 0
        %765 = vmatpush2.bf16.msra.mxu0 0
        %766 = vmatprep.mubr.bf16.mxu0 0
        %767 = vmatmul.mubr.bf16.gmra.mxu0 %v729
        %v768 = vpop.f32.mrf.mxu0
        %v769 = vadd.f32 0.0, %v768
        %v770 = vpop.f32.mrf.mxu0
        %v771 = vpop.f32.mrf.mxu0
        %v772 = vpop.f32.mrf.mxu0
        %773 = vdwg.mxu0
        %v774 = vadd.f32 %v611, %v769
        %775 = vrot.lane.b32.xlu0 %v298, 104
        %v776 = vpop.permute.xlu0 %775
        %777 = vrot.lane.b32.xlu0 %v298, 72
        %v778 = vpop.permute.xlu0 %777
        %v780 = vsel %vm302, %v776, 0
        %v783 = vsel %vm302, %v778, 0
        %785 = vmatprep.subr.bf16.mxu0 0
        %786 = vmatpush1.bf16.xpose.msra.mxu0 0
        %787 = vmatprep.subr.bf16.mxu0 0
        %788 = vmatpush1.bf16.xpose.msra.mxu0 0
        %789 = vmatprep.subr.bf16.mxu0 0
        %790 = vmatpush1.bf16.xpose.msra.mxu0 0
        %791 = vmatprep.subr.bf16.mxu0 0
        %792 = vmatpush1.bf16.xpose.msra.mxu0 0
        %793 = vmatprep.subr.bf16.mxu0 0
        %794 = vmatpush1.bf16.xpose.msra.mxu0 0
        %795 = vmatprep.subr.bf16.mxu0 0
        %796 = vmatpush1.bf16.xpose.msra.mxu0 0
        %797 = vmatprep.subr.bf16.mxu0 0
        %798 = vmatpush1.bf16.xpose.msra.mxu0 0
        %799 = vmatprep.subr.bf16.mxu0 0
        %800 = vmatpush1.bf16.xpose.msra.mxu0 %v783
        %801 = vmatprep.subr.bf16.mxu0 0
        %802 = vmatpush2.bf16.xpose.msra.mxu0 0
        %803 = vmatprep.subr.bf16.mxu0 0
        %804 = vmatpush2.bf16.xpose.msra.mxu0 0
        %805 = vmatprep.subr.bf16.mxu0 0
        %806 = vmatpush2.bf16.xpose.msra.mxu0 0
        %807 = vmatprep.subr.bf16.mxu0 0
        %808 = vmatpush2.bf16.xpose.msra.mxu0 0
        %809 = vmatprep.subr.bf16.mxu0 0
        %810 = vmatpush2.bf16.xpose.msra.mxu0 0
        %811 = vmatprep.subr.bf16.mxu0 0
        %812 = vmatpush2.bf16.xpose.msra.mxu0 0
        %813 = vmatprep.subr.bf16.mxu0 0
        %814 = vmatpush2.bf16.xpose.msra.mxu0 0
        %815 = vmatprep.subr.bf16.mxu0 0
        %816 = vmatpush2.bf16.xpose.msra.mxu0 0
        %817 = vmatprep.mubr.bf16.mxu0 0
        %818 = vmatmul.mubr.bf16.gmra.mxu0 %v780
        %v819 = vpop.f32.mrf.mxu0
        %v820 = vadd.f32 0.0, %v819
        %v821 = vpop.f32.mrf.mxu0
        %v822 = vpop.f32.mrf.mxu0
        %v823 = vpop.f32.mrf.mxu0
        %824 = vdwg.mxu0
        %v825 = vsel %vm302, %v820, -inf
        %826 = vmax.xlane.f32.xlu0 %v825
        %v827 = vpop.xlane.xlu0 %826
        %v828 = vsub.f32 %v820, %v827
        %v829 = vmul.f32 %v828, 1.442695
        %v830 = vpow.pop %v829
        %v831 = vsel %vm302, %v830, 0.0
        %832 = vadd.xlane.f32.xlu0 %v831
        %v833 = vpop.xlane.xlu0 %832
        %v834 = vrcp.pop %v833
        %v835 = vmul.f32 %v830, %v834
        %v836 = vadd.f32 %v677, %v835
        %v837 = vpack.c.bf16 %v835, %v835
        %838 = vrot.lane.b32.xlu0 %v298, 40
        %v839 = vpop.permute.xlu0 %838
        %v841 = vsel %vm302, %v837, 0
        %v844 = vsel %vm367, %v839, 0
        %846 = vmatprep.subr.bf16.mxu0 0
        %847 = vmatpush1.bf16.msra.mxu0 0
        %848 = vmatprep.subr.bf16.mxu0 0
        %849 = vmatpush1.bf16.msra.mxu0 0
        %850 = vmatprep.subr.bf16.mxu0 0
        %851 = vmatpush1.bf16.msra.mxu0 0
        %852 = vmatprep.subr.bf16.mxu0 0
        %853 = vmatpush1.bf16.msra.mxu0 0
        %854 = vmatprep.subr.bf16.mxu0 0
        %855 = vmatpush1.bf16.msra.mxu0 0
        %856 = vmatprep.subr.bf16.mxu0 0
        %857 = vmatpush1.bf16.msra.mxu0 0
        %858 = vmatprep.subr.bf16.mxu0 0
        %859 = vmatpush1.bf16.msra.mxu0 0
        %860 = vmatprep.subr.bf16.mxu0 0
        %861 = vmatpush1.bf16.msra.mxu0 %v844
        %862 = vmatprep.subr.bf16.mxu0 0
        %863 = vmatpush2.bf16.msra.mxu0 0
        %864 = vmatprep.subr.bf16.mxu0 0
        %865 = vmatpush2.bf16.msra.mxu0 0
        %866 = vmatprep.subr.bf16.mxu0 0
        %867 = vmatpush2.bf16.msra.mxu0 0
        %868 = vmatprep.subr.bf16.mxu0 0
        %869 = vmatpush2.bf16.msra.mxu0 0
        %870 = vmatprep.subr.bf16.mxu0 0
        %871 = vmatpush2.bf16.msra.mxu0 0
        %872 = vmatprep.subr.bf16.mxu0 0
        %873 = vmatpush2.bf16.msra.mxu0 0
        %874 = vmatprep.subr.bf16.mxu0 0
        %875 = vmatpush2.bf16.msra.mxu0 0
        %876 = vmatprep.subr.bf16.mxu0 0
        %877 = vmatpush2.bf16.msra.mxu0 0
        %878 = vmatprep.mubr.bf16.mxu0 0
        %879 = vmatmul.mubr.bf16.gmra.mxu0 %v841
        %v880 = vpop.f32.mrf.mxu0
        %v881 = vadd.f32 0.0, %v880
        %v882 = vpop.f32.mrf.mxu0
        %v883 = vpop.f32.mrf.mxu0
        %v884 = vpop.f32.mrf.mxu0
        %885 = vdwg.mxu0
        %v886 = vpack.c.bf16 %v881, %v881
        %v888 = vsel %vm302, %v886, 0
        %v891 = vsel %vm367, %v234, 0
        %893 = vmatprep.subr.bf16.mxu0 0
        %894 = vmatpush1.bf16.msra.mxu0 0
        %895 = vmatprep.subr.bf16.mxu0 0
        %896 = vmatpush1.bf16.msra.mxu0 0
        %897 = vmatprep.subr.bf16.mxu0 0
        %898 = vmatpush1.bf16.msra.mxu0 0
        %899 = vmatprep.subr.bf16.mxu0 0
        %900 = vmatpush1.bf16.msra.mxu0 0
        %901 = vmatprep.subr.bf16.mxu0 0
        %902 = vmatpush1.bf16.msra.mxu0 0
        %903 = vmatprep.subr.bf16.mxu0 0
        %904 = vmatpush1.bf16.msra.mxu0 0
        %905 = vmatprep.subr.bf16.mxu0 0
        %906 = vmatpush1.bf16.msra.mxu0 0
        %907 = vmatprep.subr.bf16.mxu0 0
        %908 = vmatpush1.bf16.msra.mxu0 %v891
        %909 = vmatprep.subr.bf16.mxu0 0
        %910 = vmatpush2.bf16.msra.mxu0 0
        %911 = vmatprep.subr.bf16.mxu0 0
        %912 = vmatpush2.bf16.msra.mxu0 0
        %913 = vmatprep.subr.bf16.mxu0 0
        %914 = vmatpush2.bf16.msra.mxu0 0
        %915 = vmatprep.subr.bf16.mxu0 0
        %916 = vmatpush2.bf16.msra.mxu0 0
        %917 = vmatprep.subr.bf16.mxu0 0
        %918 = vmatpush2.bf16.msra.mxu0 0
        %919 = vmatprep.subr.bf16.mxu0 0
        %920 = vmatpush2.bf16.msra.mxu0 0
        %921 = vmatprep.subr.bf16.mxu0 0
        %922 = vmatpush2.bf16.msra.mxu0 0
        %923 = vmatprep.subr.bf16.mxu0 0
        %924 = vmatpush2.bf16.msra.mxu0 0
        %925 = vmatprep.mubr.bf16.mxu0 0
        %926 = vmatmul.mubr.bf16.gmra.mxu0 %v888
        %v927 = vpop.f32.mrf.mxu0
        %v928 = vadd.f32 0.0, %v927
        %v929 = vpop.f32.mrf.mxu0
        %v930 = vpop.f32.mrf.mxu0
        %v931 = vpop.f32.mrf.mxu0
        %932 = vdwg.mxu0
        %v933 = vadd.f32 %v774, %v928
        %v934 = vunpack.c.l.bf16 %v235
        %v935 = vlaneseq
        %v936 = vshrl.u32 %v935, 7
        %v937 = vsub.s32 0, %v936
        %v938 = vrot.slane %v934, %v937
        %v939 = vadd.f32 %v933, %v938
        %vm940 = vcmask 7168
        %941 = vst.msk [vmem:[%s223] sm:$0xff] %vm940, %v939
        %v942 = vmul.f32 %v836, 0.25
        %943 = vst.msk [vmem:[%s219] sm:$0xff] %vm302, %v942
        %p944 = scmp.lt.s32.totalorder %s22, 1
        %s945 = scalar_select %p944, %s22, 1
        %s946 = smul.addr %s945, 8
        %s947 = scalar_lea.vmem %s3, %s946
        %s948 = sand.u32 %s124, 1
        %s949 = scalar_lea.sflag [#allocation4], %s948
        %s950 = sand.u32 %s124, 1
        %s951 = smul.addr %s950, 8
        %s952 = scalar_lea.vmem [#allocation5], %s951
        // Predicated region
        $region37: #{attention_model_pallas.1} parent=31 // pred_check
          %p953 = pneg %p108
        $region38: #{attention_model_pallas.1} parent=31 // pred_check_branch
          %955 = sbr.rel (%p953) target = $region40
        $region39: #{attention_model_pallas.1} parent=31 // pred_region
          _
        $region40: #{attention_model_pallas.1} parent=31 // pred_fallthru
          _
        // Predicated region
        $region41: #{attention_model_pallas.1} parent=31 // pred_check
          %p956 = pneg %p134
        $region42: #{attention_model_pallas.1} parent=31 // pred_check_branch
          %958 = sbr.rel (%p956) target = $region44
        $region43: #{attention_model_pallas.1} parent=31 // pred_region
          %s960 = ssub.s32 128, 128
          %961 = vsyncadd %s949, %s960
          %s962 = smul.addr %s22, 128
          %s963 = scalar_lea.hbm %s4, %s962
          %s965 = sshll.u32 %s952, 4
          %s966 = int_to_ptr.vmem [resolvable:$true] %s965
          %968 = dma.vmem_to_hbm [thread:$0]  %s966, 128, %s963, %s949
        $region44: #{attention_model_pallas.1} parent=31 // pred_fallthru
          _
      $region32: #{attention_model_pallas.1} parent=5 // pred_fallthru
        _
      %p969 = scmp.le.s32.totalorder 2, %s17
      // Predicated region
      $region45: #{attention_model_pallas.1} parent=5 // pred_check
        %p970 = pneg %p969
      $region46: #{attention_model_pallas.1} parent=5 // pred_check_branch
        %972 = sbr.rel (%p970) target = $region48
      $region47: #{attention_model_pallas.1} parent=5 // pred_region
        %s973 = ssub.s32 %s17, 2
        // Predicated region
        $region49: #{attention_model_pallas.1} parent=47 // pred_check
          %p974 = pneg %p114
        $region50: #{attention_model_pallas.1} parent=47 // pred_check_branch
          %976 = sbr.rel (%p974) target = $region52
        $region51: #{attention_model_pallas.1} parent=47 // pred_region
          %p977 = scmp.lt.s32.totalorder %s23, 1
          %s978 = scalar_select %p977, %s23, 1
          %s979 = smul.addr %s978, 8
          %s980 = scalar_lea.vmem %s3, %s979
        $region52: #{attention_model_pallas.1} parent=47 // pred_fallthru
          _
        // Predicated region
        $region53: #{attention_model_pallas.1} parent=47 // pred_check
          %p981 = pneg %p140
        $region54: #{attention_model_pallas.1} parent=47 // pred_check_branch
          %983 = sbr.rel (%p981) target = $region56
        $region55: #{attention_model_pallas.1} parent=47 // pred_region
          %s984 = sand.u32 %s125, 1
          %s985 = scalar_lea.sflag [#allocation4], %s984
          %s986 = sand.u32 %s125, 1
          %s987 = smul.addr %s986, 8
          %s988 = scalar_lea.vmem [#allocation5], %s987
          %989 = dma.done %s985, 128
        $region56: #{attention_model_pallas.1} parent=47 // pred_fallthru
          _
      $region48: #{attention_model_pallas.1} parent=5 // pred_fallthru
        _
    $region6: #{attention_model_pallas.1} parent=1 // loop_footer
      %s21 = sadd.s32 1, %s17
    $region7: #{attention_model_pallas.1} parent=1 // loop_footer_branch
      %16 = sbr.rel target = $region3
    $region8: #{attention_model_pallas.1} parent=1 // loop_exit
      _
    %990 = vsyncpa [#allocation3], 1
    %s991 = scalar_lea.sflag [#allocation3], 1
    %992 = vsyncpa %s991, 1
    %993 = vsyncpa [#allocation4], 1
    %s994 = scalar_lea.sflag [#allocation4], 1
    %995 = vsyncpa %s994, 1

</llo_original>
